<compile_context>
chip_gen: v7x
topology: tpu7x:2x2x1
jax: 0.10.0
libtpu: 0.0.40
codegen_flags: <defaults>
</compile_context>

<pallas_src>
import functools

import jax
import jax.numpy as jnp
from jax.experimental import pallas as pl
from jax.experimental.pallas import tpu as pltpu

_LANES = 128


def _num_tensorcores():
    """1 on v5e/v6e (single TC per chip), 2 on v7x."""
    try:
        kind = jax.devices()[0].device_kind.lower()
    except Exception:
        return 1
    return 2 if "v7" in kind else 1


def _weighted_focal_l1_kernel(x_ref, t_ref, w_ref, o_ref, acc_ref, *,
                              n, beta, gamma, activate):
    p = pl.program_id(0)
    i = pl.program_id(1)
    tiles_per_part = pl.num_programs(1)
    tile_r = x_ref.shape[0]

    @pl.when(i == 0)
    def _init():
        acc_ref[...] = jnp.zeros_like(acc_ref)

    x = x_ref[...].astype(jnp.float32)   # (tile_r, 128) predictions
    t = t_ref[...].astype(jnp.float32)   # (tile_r, 128) targets[0]
    w = w_ref[...].astype(jnp.float32)   # (tile_r, 128) raw weights (targets[1])

    adiff = jnp.abs(x - t)               # F.l1_loss(..., reduction='none')

    # Focal factor: exactly one EUP tanh per element.
    if activate == 'tanh':
        base = jnp.tanh(float(beta) * adiff)
    else:  # 'sigmoid' (default); identity: 2*sigmoid(z) - 1 == tanh(z/2)
        base = jnp.tanh((0.5 * float(beta)) * adiff)

    g = float(gamma)
    if g == 1.0:
        focal = base
    elif g == 0.0:
        focal = jnp.ones_like(base)
    elif g == int(g) and 0.0 < g <= 8.0:
        focal = base
        for _ in range(int(g) - 1):
            focal = focal * base
    else:
        focal = base ** jnp.float32(g)

    loss = adiff * focal * (w + 1.0)     # weights = targets[1] + 1

    # Mask out padded / out-of-range elements.  Works for the ragged column tail,
    # for the partially out-of-bounds last block (undefined DMA padding), and for
    # clamped duplicate blocks on the "parallel" axis (raw block id beyond the data).
    row_base = (p * tiles_per_part + i) * tile_r
    row_ids = jax.lax.broadcasted_iota(jnp.int32, (tile_r, _LANES), 0) + row_base
    col_ids = jax.lax.broadcasted_iota(jnp.int32, (tile_r, _LANES), 1)
    mask = (row_ids * _LANES + col_ids) < n
    loss = jnp.where(mask, loss, 0.0)

    # Pure vreg-wise VPU accumulate; all cross-lane/sublane reduction is deferred
    # to the single finalize step below.
    acc_ref[...] += loss

    @pl.when(i == tiles_per_part - 1)
    def _finalize():
        total = jnp.sum(acc_ref[...], keepdims=True) * (1.0 / float(n))   # (1, 1)
        o_ref[...] = total.reshape(1, 1, 1)


def weighted_focal_l1_loss(inputs, target, weight, *,
                           beta=0.2, gamma=1, activate='sigmoid',
                           num_parts=None, max_tile_r=2048):
    """inputs: (N, 1) or (N,); target == targets[0]; weight == targets[1] (shape (N,))."""
    x = jnp.ravel(inputs)
    t = jnp.ravel(target)
    w = jnp.ravel(weight)
    n = x.shape[0]
    assert t.shape[0] == n and w.shape[0] == n and n > 0

    if num_parts is None:
        num_parts = _num_tensorcores()

    # Sublane packing of the block's second-minor dim: 8 for f32, 16 for bf16, 32 for int8.
    def _packing(dt):
        return 8 * max(1, 4 // jnp.dtype(dt).itemsize)
    row_mult = max(_packing(a.dtype) for a in (x, t, w))

    rows = pl.cdiv(n, _LANES)
    pad = rows * _LANES - n
    if pad:
        # Only the ragged <128-element tail is ever padded; allow_input_fusion below lets
        # XLA fuse these pads into the pallas_call operands instead of materializing them.
        x = jnp.pad(x, (0, pad))
        t = jnp.pad(t, (0, pad))
        w = jnp.pad(w, (0, pad))
    x2 = x.reshape(rows, _LANES)   # free bitcast when pad == 0
    t2 = t.reshape(rows, _LANES)
    w2 = w.reshape(rows, _LANES)

    # Size tiles to the data (bounded by max_tile_r), rounded to the sublane packing.
    desired_blocks = max(pl.cdiv(rows, max_tile_r),
                         num_parts if rows >= num_parts * row_mult else 1)
    tile_r = pl.cdiv(rows, desired_blocks)
    tile_r = pl.cdiv(tile_r, row_mult) * row_mult
    tile_r = min(tile_r, rows)            # block equal to the full dim stays legal
    total_blocks = pl.cdiv(rows, tile_r)
    parts = min(num_parts, total_blocks)
    tiles_per_part = pl.cdiv(total_blocks, parts)
    last_block = total_blocks - 1

    def in_index(pi, ti):
        blk = pi * tiles_per_part + ti
        # Clamp so no DMA ever starts past the array; duplicate blocks are fully masked.
        return (jnp.minimum(blk, last_block), 0)

    in_spec = pl.BlockSpec((tile_r, _LANES), in_index)

    kernel = functools.partial(
        _weighted_focal_l1_kernel,
        n=int(n), beta=float(beta), gamma=gamma, activate=activate)

    out = pl.pallas_call(
        kernel,
        out_shape=jax.ShapeDtypeStruct((parts, 1, 1), jnp.float32),
        grid=(parts, tiles_per_part),
        in_specs=[in_spec, in_spec, in_spec],
        out_specs=pl.BlockSpec((1, 1, 1), lambda pi, ti: (pi, 0, 0)),
        scratch_shapes=[pltpu.VMEM((tile_r, _LANES), jnp.float32)],
        compiler_params=pltpu.CompilerParams(
            dimension_semantics=("parallel", "arbitrary"),
            allow_input_fusion=[True, True, True]),
    )(x2, t2, w2)

    if parts == 1:
        return out.reshape(())            # bitcast; no follow-up reduce kernel
    return jnp.sum(out)                   # tiny cross-TensorCore combine (v7x only)


def _reference(inputs, target, weight, *, beta=0.2, gamma=1, activate='sigmoid'):
    x = jnp.ravel(inputs).astype(jnp.float32)
    t = jnp.ravel(target).astype(jnp.float32)
    weights = jnp.ravel(weight).astype(jnp.float32) + 1.0
    loss = jnp.abs(x - t)
    if activate == 'tanh':
        loss = loss * jnp.tanh(beta * jnp.abs(x - t)) ** gamma
    else:
        loss = loss * (2.0 * jax.nn.sigmoid(beta * jnp.abs(x - t)) - 1.0) ** gamma
    return jnp.mean(loss * weights)


if __name__ == "__main__":
    keys = jax.random.split(jax.random.PRNGKey(0), 9)

    # Case 1: default config (sigmoid, gamma=1), tiny ragged N -> single partial block.
    N = 8
    x = jax.random.normal(keys[0], (N, 1), dtype=jnp.float32)
    t = jax.random.normal(keys[1], (N, 1), dtype=jnp.float32)
    w = jax.random.uniform(keys[2], (N,), dtype=jnp.float32)
    out = jax.block_until_ready(weighted_focal_l1_loss(x, t, w))
    ref = _reference(x, t, w)
    assert jnp.allclose(out, ref, rtol=1e-5, atol=1e-6), (out, ref)

    # Case 2: tanh activation, integer gamma>1; multi-block grid with in-kernel masking,
    # a clamped duplicate block, and a 2-wide "parallel" axis (small max_tile_r only to
    # exercise the pipeline at small N).
    N = 3000
    x = jax.random.normal(keys[3], (N, 1), dtype=jnp.float32)
    t = jax.random.normal(keys[4], (N, 1), dtype=jnp.float32)
    w = jax.random.uniform(keys[5], (N,), dtype=jnp.float32)
    out2 = jax.block_until_ready(weighted_focal_l1_loss(
        x, t, w, beta=0.5, gamma=2, activate='tanh', num_parts=2, max_tile_r=8))
    ref2 = _reference(x, t, w, beta=0.5, gamma=2, activate='tanh')
    assert jnp.allclose(out2, ref2, rtol=1e-5, atol=1e-6), (out2, ref2)

    # Case 3: bf16 inputs, N % 128 == 0 -> zero-copy reshape, native-dtype DMA.
    N = 1024
    xb = jax.random.normal(keys[6], (N, 1), dtype=jnp.bfloat16)
    tb = jax.random.normal(keys[7], (N, 1), dtype=jnp.bfloat16)
    wb = jax.random.uniform(keys[8], (N,), dtype=jnp.bfloat16)
    out3 = jax.block_until_ready(weighted_focal_l1_loss(xb, tb, wb))
    ref3 = _reference(xb, tb, wb)
    assert jnp.allclose(out3, ref3, rtol=1e-4, atol=1e-5), (out3, ref3)

    print("KERNEL_OK")
</pallas_src>

<mosaic_0001>
module attributes {stable_mosaic.version = 11 : i64} {
  func.func @_weighted_focal_l1_kernel(%arg0: i32, %arg1: i32, %arg2: memref<1x128xf32, #tpu.memory_space<vmem>>, %arg3: memref<1x128xf32, #tpu.memory_space<vmem>>, %arg4: memref<1x128xf32, #tpu.memory_space<vmem>>, %arg5: memref<1x1x1xf32, #tpu.memory_space<vmem>>, %arg6: memref<1x128xf32, #tpu.memory_space<vmem>>) attributes {dimension_semantics = [#tpu.dimension_semantics<parallel>, #tpu.dimension_semantics<arbitrary>], iteration_bounds = array<i64: 1, 1>, scalar_prefetch = 0 : i64, scratch_operands = 1 : i64, tpu.core_type = #tpu.core_type<tc>, window_params = [{transform_indices = @transform_0, window_bounds = array<i64: 1, 128>}, {transform_indices = @transform_1, window_bounds = array<i64: 1, 128>}, {transform_indices = @transform_2, window_bounds = array<i64: 1, 128>}, {transform_indices = @transform_3, window_bounds = array<i64: 1, 1, 1>}]} {
    %c0_i32 = arith.constant 0 : i32
    %0 = arith.cmpi eq, %arg1, %c0_i32 : i32
    %1 = arith.extui %0 : i1 to i32
    %c0_i32_0 = arith.constant 0 : i32
    %2 = arith.cmpi ne, %1, %c0_i32_0 : i32
    scf.if %2 {
      %cst_15 = arith.constant 0.000000e+00 : f32
      %35 = vector.broadcast %cst_15 : f32 to vector<1x128xf32>
      %c0_16 = arith.constant 0 : index
      %c0_17 = arith.constant 0 : index
      %36 = vector.load %arg6[%c0_16, %c0_17] : memref<1x128xf32, #tpu.memory_space<vmem>>, vector<1x128xf32>
      tpu.vector_store %arg6[%c0_16, %c0_17], %35 {strides = array<i32>} : memref<1x128xf32, #tpu.memory_space<vmem>>, vector<1x128xf32>,
    } else {
    }
    %c0 = arith.constant 0 : index
    %c0_1 = arith.constant 0 : index
    %3 = vector.load %arg2[%c0, %c0_1] : memref<1x128xf32, #tpu.memory_space<vmem>>, vector<1x128xf32>
    %c0_2 = arith.constant 0 : index
    %c0_3 = arith.constant 0 : index
    %4 = vector.load %arg3[%c0_2, %c0_3] : memref<1x128xf32, #tpu.memory_space<vmem>>, vector<1x128xf32>
    %c0_4 = arith.constant 0 : index
    %c0_5 = arith.constant 0 : index
    %5 = vector.load %arg4[%c0_4, %c0_5] : memref<1x128xf32, #tpu.memory_space<vmem>>, vector<1x128xf32>
    %6 = arith.subf %3, %4 : vector<1x128xf32>
    %7 = math.absf %6 : vector<1x128xf32>
    %cst = arith.constant 1.000000e-01 : f32
    %8 = vector.broadcast %cst : f32 to vector<1x128xf32>
    %9 = arith.mulf %8, %7 : vector<1x128xf32>
    %10 = math.tanh %9 : vector<1x128xf32>
    %11 = arith.mulf %7, %10 : vector<1x128xf32>
    %cst_6 = arith.constant 1.000000e+00 : f32
    %12 = vector.broadcast %cst_6 : f32 to vector<1x128xf32>
    %13 = arith.addf %5, %12 : vector<1x128xf32>
    %14 = arith.mulf %11, %13 : vector<1x128xf32>
    %c1_i32 = arith.constant 1 : i32
    %15 = arith.muli %arg0, %c1_i32 : i32
    %16 = arith.addi %15, %arg1 : i32
    %c1_i32_7 = arith.constant 1 : i32
    %17 = arith.muli %16, %c1_i32_7 : i32
    %18 = tpu.iota {dimensions = array<i32: 0>} : vector<1x128xi32>
    %19 = vector.broadcast %17 : i32 to vector<1x128xi32>
    %20 = arith.addi %18, %19 : vector<1x128xi32>
    %21 = tpu.iota {dimensions = array<i32: 1>} : vector<1x128xi32>
    %c128_i32 = arith.constant 128 : i32
    %22 = vector.broadcast %c128_i32 : i32 to vector<1x128xi32>
    %23 = arith.muli %20, %22 : vector<1x128xi32>
    %24 = arith.addi %23, %21 : vector<1x128xi32>
    %c8_i32 = arith.constant 8 : i32
    %25 = vector.broadcast %c8_i32 : i32 to vector<1x128xi32>
    %26 = arith.cmpi slt, %24, %25 : vector<1x128xi32>
    %cst_8 = arith.constant 0.000000e+00 : f32
    %27 = vector.broadcast %cst_8 : f32 to vector<1x128xf32>
    %28 = arith.select %26, %14, %27 : vector<1x128xi1>, vector<1x128xf32>
    %c0_9 = arith.constant 0 : index
    %c0_10 = arith.constant 0 : index
    %29 = vector.load %arg6[%c0_9, %c0_10] : memref<1x128xf32, #tpu.memory_space<vmem>>, vector<1x128xf32>
    %30 = arith.addf %29, %28 : vector<1x128xf32>
    %c0_11 = arith.constant 0 : index
    %c0_12 = arith.constant 0 : index
    %31 = vector.load %arg6[%c0_11, %c0_12] : memref<1x128xf32, #tpu.memory_space<vmem>>, vector<1x128xf32>
    tpu.vector_store %arg6[%c0_11, %c0_12], %30 {strides = array<i32>} : memref<1x128xf32, #tpu.memory_space<vmem>>, vector<1x128xf32>,
    %c0_i32_13 = arith.constant 0 : i32
    %32 = arith.cmpi eq, %arg1, %c0_i32_13 : i32
    %33 = arith.extui %32 : i1 to i32
    %c0_i32_14 = arith.constant 0 : i32
    %34 = arith.cmpi ne, %33, %c0_i32_14 : i32
    scf.if %34 {
      %c0_15 = arith.constant 0 : index
      %c0_16 = arith.constant 0 : index
      %35 = vector.load %arg6[%c0_15, %c0_16] : memref<1x128xf32, #tpu.memory_space<vmem>>, vector<1x128xf32>
      %36 = vector.shape_cast %35 : vector<1x128xf32> to vector<1x1x128xf32>
      %cst_17 = arith.constant dense<0.000000e+00> : vector<1xf32>
      %37 = vector.multi_reduction <add>, %36, %cst_17 [1, 2] : vector<1x1x128xf32> to vector<1xf32>
      %38 = vector.shape_cast %37 : vector<1xf32> to vector<1x1x1xf32>
      %39 = vector.extract %38[0, 0, 0] : f32 from vector<1x1x1xf32>
      %40 = vector.broadcast %39 : f32 to vector<1x1xf32>
      %cst_18 = arith.constant 1.250000e-01 : f32
      %41 = vector.broadcast %cst_18 : f32 to vector<1x1xf32>
      %42 = arith.mulf %40, %41 : vector<1x1xf32>
      %43 = vector.shape_cast %42 : vector<1x1xf32> to vector<1x1x1xf32>
      %c0_19 = arith.constant 0 : index
      %c0_20 = arith.constant 0 : index
      %c0_21 = arith.constant 0 : index
      %44 = vector.load %arg5[%c0_19, %c0_20, %c0_21] : memref<1x1x1xf32, #tpu.memory_space<vmem>>, vector<1x1x1xf32>
      tpu.vector_store %arg5[%c0_19, %c0_20, %c0_21], %43 {strides = array<i32>} : memref<1x1x1xf32, #tpu.memory_space<vmem>>, vector<1x1x1xf32>,
    } else {
    }
    return
  }
  func.func @transform_0(%arg0: i32, %arg1: i32) -> (i32, i32) {
    %c1_i32 = arith.constant 1 : i32
    %0 = arith.muli %arg0, %c1_i32 : i32
    %1 = arith.addi %0, %arg1 : i32
    %c0_i32 = arith.constant 0 : i32
    %2 = arith.minsi %1, %c0_i32 : i32
    %c0_i32_0 = arith.constant 0 : i32
    %c0_i32_1 = arith.constant 0 : i32
    return %2, %c0_i32_0 : i32, i32
  }
  func.func @transform_1(%arg0: i32, %arg1: i32) -> (i32, i32) {
    %c1_i32 = arith.constant 1 : i32
    %0 = arith.muli %arg0, %c1_i32 : i32
    %1 = arith.addi %0, %arg1 : i32
    %c0_i32 = arith.constant 0 : i32
    %2 = arith.minsi %1, %c0_i32 : i32
    %c0_i32_0 = arith.constant 0 : i32
    %c0_i32_1 = arith.constant 0 : i32
    return %2, %c0_i32_0 : i32, i32
  }
  func.func @transform_2(%arg0: i32, %arg1: i32) -> (i32, i32) {
    %c1_i32 = arith.constant 1 : i32
    %0 = arith.muli %arg0, %c1_i32 : i32
    %1 = arith.addi %0, %arg1 : i32
    %c0_i32 = arith.constant 0 : i32
    %2 = arith.minsi %1, %c0_i32 : i32
    %c0_i32_0 = arith.constant 0 : i32
    %c0_i32_1 = arith.constant 0 : i32
    return %2, %c0_i32_0 : i32, i32
  }
  func.func @transform_3(%arg0: i32, %arg1: i32) -> (i32, i32, i32) {
    %c0_i32 = arith.constant 0 : i32
    %c0_i32_0 = arith.constant 0 : i32
    %c0_i32_1 = arith.constant 0 : i32
    return %arg0, %c0_i32, %c0_i32_0 : i32, i32, i32
  }
}

</mosaic_0001>

<llo_original>
// kernel: tpu_custom_call.1
$region0: #{tpu_custom_call.1}
  #allocation0 [shape = 'u32[]', space=smem, size = 0x4, offset = 0x4, fixed_abs, tag = 'smem constant byte address 0x4 - core index']
  #allocation1 [shape = 'u32[144,128]{1,0:T(1,128)}', space=vmem, size = 0x12000, scoped, tag = 'internal scratch']
  #allocation2 [shape = 'f32[1,128]{1,0:T(1,128)}', space=vmem, size = 0x200, scoped, tag = 'scratch operand']
  %s0 = inlined_call_operand.hbm [shape: f32[1,128], index: 0, kind: input, shape index: {}]
  %s1 = inlined_call_operand.vmem [shape: f32[1,128], index: 1, kind: input, shape index: {}]
  %s2 = inlined_call_operand.vmem [shape: f32[1,128], index: 2, kind: input, shape index: {}]
  %s3 = inlined_call_operand.hbm [shape: f32[1,1,1], index: 3, kind: output, shape index: {}]
  %s4 = sld [smem:[#allocation0]]
  $region34: #{tpu_custom_call.1} parent=0
    _
  %s6 = ssub.s32 1, %s4
  %s7 = scalar_select 0, %s6, %s4
  $region1: #{tpu_custom_call.1} parent=0
    #allocation3 [shape = 'u8[512]{0}', space=vmem, size = 0x400, scoped, tag = 'input window, operand 0, single buffered']
    #allocation4 [shape = 's32[1]{0}', space=sflag, size = 0x4, scoped, tag = 'scoped memory for tpu_custom_call.1']
    #allocation5 [shape = 's32[1]{0}', space=sflag, size = 0x4, scoped, tag = 'scoped memory for tpu_custom_call.1']
    #allocation6 [shape = 'u8[512]{0}', space=vmem, size = 0x400, scoped, tag = 'output window, operand 0, single buffered']
    %8 = vsyncpa [#allocation4], 0
    %9 = vsyncpa [#allocation5], 0
    // Predicated region
    $region2: #{tpu_custom_call.1} parent=1 // pred_check
      _
    $region3: #{tpu_custom_call.1} parent=1 // pred_check_branch
      %11 = sbr.rel (0) target = $region5
    $region4: #{tpu_custom_call.1} parent=1 // pred_region
      %s12 = sadd.s32 0, 0
      %p13 = scmp.lt.s32.totalorder %s12, 0
      %s14 = scalar_select %p13, %s12, 0
      %s16 = ssub.s32 16, 16
      %17 = vsyncadd [#allocation4], %s16
      %s18 = smul.addr %s14, 16
      %s19 = scalar_lea.hbm %s0, %s18
      %s21 = sshll.u32 [#allocation3], 4
      %s22 = int_to_ptr.vmem [resolvable:$true] %s21
      %24 = dma.hbm_to_vmem [thread:$0]  %s19, 16, %s22, [#allocation4]
    $region5: #{tpu_custom_call.1} parent=1 // pred_fallthru
      _
    // Predicated region
    $region6: #{tpu_custom_call.1} parent=1 // pred_check
      _
    $region7: #{tpu_custom_call.1} parent=1 // pred_check_branch
      %26 = sbr.rel (0) target = $region9
    $region8: #{tpu_custom_call.1} parent=1 // pred_region
      %s27 = sadd.s32 0, 0
      %p28 = scmp.lt.s32.totalorder %s27, 0
      %s29 = scalar_select %p28, %s27, 0
      %p30 = scmp.lt.s32.totalorder %s29, 0
      %s31 = scalar_select %p30, %s29, 0
      %s32 = scalar_lea.vmem %s1, %s31
      %s33 = sadd.s32 0, 0
      %p34 = scmp.lt.s32.totalorder %s33, 0
      %s35 = scalar_select %p34, %s33, 0
    $region9: #{tpu_custom_call.1} parent=1 // pred_fallthru
      _
    // Predicated region
    $region10: #{tpu_custom_call.1} parent=1 // pred_check
      _
    $region11: #{tpu_custom_call.1} parent=1 // pred_check_branch
      %37 = sbr.rel (0) target = $region13
    $region12: #{tpu_custom_call.1} parent=1 // pred_region
      %s38 = sadd.s32 0, 0
      %p39 = scmp.lt.s32.totalorder %s38, 0
      %s40 = scalar_select %p39, %s38, 0
      %p41 = scmp.lt.s32.totalorder %s40, 0
      %s42 = scalar_select %p41, %s40, 0
      %s43 = scalar_lea.vmem %s2, %s42
      %s44 = sadd.s32 0, 0
      %p45 = scmp.lt.s32.totalorder %s44, 0
      %s46 = scalar_select %p45, %s44, 0
    $region13: #{tpu_custom_call.1} parent=1 // pred_fallthru
      _
    // Predicated region
    $region14: #{tpu_custom_call.1} parent=1 // pred_check
      _
    $region15: #{tpu_custom_call.1} parent=1 // pred_check_branch
      %48 = sbr.rel (0) target = $region17
    $region16: #{tpu_custom_call.1} parent=1 // pred_region
      %49 = dma.done [#allocation4], 16
    $region17: #{tpu_custom_call.1} parent=1 // pred_fallthru
      _
    %s50 = sadd.s32 0, 0
    %p51 = scmp.lt.s32.totalorder %s50, 0
    %s52 = scalar_select %p51, %s50, 0
    %p53 = scmp.lt.s32.totalorder %s52, 0
    %s54 = scalar_select %p53, %s52, 0
    %s55 = scalar_lea.vmem %s1, %s54
    %s56 = sadd.s32 0, 0
    %p57 = scmp.lt.s32.totalorder %s56, 0
    %s58 = scalar_select %p57, %s56, 0
    %p59 = scmp.lt.s32.totalorder %s58, 0
    %s60 = scalar_select %p59, %s58, 0
    %s61 = scalar_lea.vmem %s2, %s60
    %s62 = sadd.s32 0, 0
    %p63 = scmp.lt.s32.totalorder %s62, 0
    %s64 = scalar_select %p63, %s62, 0
    %s65 = sadd.s32 0, 0
    %p66 = scmp.lt.s32.totalorder %s65, 0
    %s67 = scalar_select %p66, %s65, 0
    %p68 = scmp.lt.s32.totalorder %s67, 0
    %s69 = scalar_select %p68, %s67, 0
    %s70 = scalar_lea.vmem %s1, %s69
    %s71 = sadd.s32 0, 0
    %p72 = scmp.lt.s32.totalorder %s71, 0
    %s73 = scalar_select %p72, %s71, 0
    %s74 = sadd.s32 0, 0
    %p75 = scmp.lt.s32.totalorder %s74, 0
    %s76 = scalar_select %p75, %s74, 0
    %p77 = scmp.lt.s32.totalorder %s76, 0
    %s78 = scalar_select %p77, %s76, 0
    %s79 = scalar_lea.vmem %s2, %s78
    %s80 = sadd.s32 0, 0
    %p81 = scmp.lt.s32.totalorder %s80, 0
    %s82 = scalar_select %p81, %s80, 0
    %p83 = scmp.eq.s32.totalorder 0, 0
    // Predicated region
    $region18: #{tpu_custom_call.1} parent=1 // pred_check
      %p84 = pneg %p83
    $region19: #{tpu_custom_call.1} parent=1 // pred_check_branch
      %86 = sbr.rel (%p84) target = $region21
    $region20: #{tpu_custom_call.1} parent=1 // pred_region
      %87 = vst [vmem:[#allocation2] sm:$0x1] 0.0
    $region21: #{tpu_custom_call.1} parent=1 // pred_fallthru
      _
    %v88 = vld [vmem:[#allocation3] sm:$0x1]
    %v89 = vld [vmem:[%s70] sm:$0x1]
    %v90 = vld [vmem:[%s79] sm:$0x1]
    %v91 = vsub.f32 %v88, %v89
    %v92 = vand.u32 2147483647, %v91
    %v93 = vmul.f32 %v92, 0.1
    %v94 = vtanh.pop %v93
    %v95 = vmul.f32 %v92, %v94
    %v96 = vadd.f32 %v90, 1.0
    %v97 = vmul.f32 %v95, %v96
    %s98 = sadd.s32 0, 0
    %v99 = vlaneseq
    %v100 = vshrl.u32 %v99, 7
    %v101 = vstv %s98
    %v102 = vadd.s32 %v100, %v101
    %v103 = vlaneseq
    %v104 = vand.u32 %v103, 127
    %v105 = vmul.u32 %v102, 128
    %v106 = vadd.s32 %v105, %v104
    %vm107 = vcmp.lt.s32.totalorder %v106, 8
    %v108 = vsel %vm107, %v97, 0.0
    %v109 = vld [vmem:[#allocation2] sm:$0x1]
    %v110 = vadd.f32 %v109, %v108
    %111 = vst [vmem:[#allocation2] sm:$0x1] %v110
    // Predicated region
    $region22: #{tpu_custom_call.1} parent=1 // pred_check
      %p112 = pneg %p83
    $region23: #{tpu_custom_call.1} parent=1 // pred_check_branch
      %114 = sbr.rel (%p112) target = $region25
    $region24: #{tpu_custom_call.1} parent=1 // pred_region
      %v115 = vld [vmem:[#allocation2] sm:$0x1]
      %vm116 = vcmask 1040384
      %v117 = vsel %vm116, %v115, 0.0
      %118 = vadd.xlane.f32.xlu0 %v117
      %v119 = vpop.xlane.xlu0 %118
      %v120 = vrot.slane %v119, 4
      %v121 = vadd.f32 %v119, %v120
      %v122 = vrot.slane %v121, 2
      %v123 = vadd.f32 %v121, %v122
      %v124 = vrot.slane %v123, 1
      %v125 = vadd.f32 %v123, %v124
      %s126 = vtos %v125
      %v127 = vstv %s126
      %v128 = vmul.f32 %v127, 0.125
      %vm129 = vcmask 0
      %130 = vst.msk [vmem:[#allocation6] sm:$0x1] %vm129, %v128
    $region25: #{tpu_custom_call.1} parent=1 // pred_fallthru
      _
    // Predicated region
    $region26: #{tpu_custom_call.1} parent=1 // pred_check
      _
    $region27: #{tpu_custom_call.1} parent=1 // pred_check_branch
      %132 = sbr.rel (0) target = $region29
    $region28: #{tpu_custom_call.1} parent=1 // pred_region
      %s134 = ssub.s32 16, 16
      %135 = vsyncadd [#allocation5], %s134
      %s137 = sshll.u32 [#allocation6], 4
      %s138 = int_to_ptr.vmem [resolvable:$true] %s137
      %140 = dma.vmem_to_hbm [thread:$0]  %s138, 16, %s3, [#allocation5]
    $region29: #{tpu_custom_call.1} parent=1 // pred_fallthru
      _
    // Predicated region
    $region30: #{tpu_custom_call.1} parent=1 // pred_check
      _
    $region31: #{tpu_custom_call.1} parent=1 // pred_check_branch
      %142 = sbr.rel (0) target = $region33
    $region32: #{tpu_custom_call.1} parent=1 // pred_region
      %143 = dma.done [#allocation5], 16
    $region33: #{tpu_custom_call.1} parent=1 // pred_fallthru
      _
    %144 = vsyncpa [#allocation4], 1
    %145 = vsyncpa [#allocation5], 1

</llo_original>
